<compile_context>
chip_gen: v7x
topology: tpu7x:2x2x1
jax: 0.10.0
libtpu: 0.0.40
codegen_flags: <defaults>
</compile_context>

<pallas_src>
import jax
import jax.numpy as jnp
from jax.experimental import pallas as pl
from jax.experimental.pallas import tpu as pltpu

PCT = 0.2
MAX_NUM = 4


def _pick_tile(n, unit, max_tile):
    """Largest divisor of n that is a multiple of `unit` and <= max_tile.

    Falls back to n (full extent), which is always a legal block extent.
    """
    best = None
    for t in range(unit, min(n, max_tile) + 1, unit):
        if n % t == 0:
            best = t
    return best if best is not None else n


# ---------------------------------------------------------------------------
# Kernel 1: tiled global statistics (mean, unbiased std, min, max)
# ---------------------------------------------------------------------------
def _make_stats_kernel(n_total):
    n_total = float(n_total)

    def kernel(x_ref, s_ref, acc_ref):
        i = pl.program_id(0)
        j = pl.program_id(1)

        @pl.when((i == 0) & (j == 0))
        def _init():
            acc_ref[0] = jnp.float32(0.0)        # running sum
            acc_ref[1] = jnp.float32(0.0)        # running sum of squares
            acc_ref[2] = jnp.float32(jnp.inf)    # running min
            acc_ref[3] = jnp.float32(-jnp.inf)   # running max

        xb = x_ref[...].astype(jnp.float32)
        acc_ref[0] = acc_ref[0] + jnp.sum(xb)
        acc_ref[1] = acc_ref[1] + jnp.sum(xb * xb)
        acc_ref[2] = jnp.minimum(acc_ref[2], jnp.min(xb))
        acc_ref[3] = jnp.maximum(acc_ref[3], jnp.max(xb))

        @pl.when((i == pl.num_programs(0) - 1) & (j == pl.num_programs(1) - 1))
        def _finalize():
            s = acc_ref[0]
            ss = acc_ref[1]
            mean = s / n_total
            var = (ss - n_total * mean * mean) / (n_total - 1.0)  # unbiased
            s_ref[0] = mean
            s_ref[1] = jnp.sqrt(jnp.maximum(var, jnp.float32(0.0)))
            s_ref[2] = acc_ref[2]
            s_ref[3] = acc_ref[3]

    return kernel


def _global_stats(x2, tile_bc, tile_hw):
    bc, hw = x2.shape
    return pl.pallas_call(
        _make_stats_kernel(bc * hw),
        out_shape=jax.ShapeDtypeStruct((4,), jnp.float32),
        grid=(bc // tile_bc, hw // tile_hw),
        in_specs=[pl.BlockSpec((tile_bc, tile_hw), lambda i, j: (i, j))],
        out_specs=pl.BlockSpec(memory_space=pltpu.MemorySpace.SMEM),
        scratch_shapes=[pltpu.SMEM((4,), jnp.float32)],
        compiler_params=pltpu.CompilerParams(
            dimension_semantics=("arbitrary", "arbitrary"),
            vmem_limit_bytes=32 * 1024 * 1024),
    )(x2)


# ---------------------------------------------------------------------------
# Kernel 2: tiled masked fill (the elementwise hot path)
# ---------------------------------------------------------------------------
def _make_erase_kernel(img_w, tile_hw, max_num):
    def kernel(coords_ref, x_ref, noise_ref, o_ref):
        # coords_ref: SMEM (4*max_num,) int32, [stx, szx, sty, szy] per erase
        #             (szx == szy == 0 for inactive erases -> empty rectangle)
        hw0 = pl.program_id(1) * tile_hw
        flat = hw0 + jax.lax.broadcasted_iota(jnp.int32, (1, tile_hw), 1)
        row = flat // img_w                      # hoisted: shared by all erases
        col = flat % img_w

        mask = None                              # union of all active patches
        for i in range(max_num):
            stx = coords_ref[4 * i + 0]
            szx = coords_ref[4 * i + 1]
            sty = coords_ref[4 * i + 2]
            szy = coords_ref[4 * i + 3]
            m = ((row >= stx) & (row < stx + szx)
                 & (col >= sty) & (col < sty + szy))
            mask = m if mask is None else (mask | m)

        # noise is already scaled to N(mean, std) and clamped to [min, max];
        # untouched elements are within [min, max] by definition, so the
        # original per-erase clamp is exactly this single masked select.
        o_ref[...] = jnp.where(mask, noise_ref[...], x_ref[...])

    return kernel


def rand_erase(x, key, pct=PCT, max_num=MAX_NUM):
    """Pallas implementation of RandErase.forward(x)."""
    n, c, h, w = x.shape
    bc, hw = n * c, h * w
    x2 = x.reshape(bc, hw)                       # lane-dense 2-D view

    tile_bc = _pick_tile(bc, 8, 64)
    tile_hw = _pick_tile(hw, 128, 4096)

    # ---- kernel 1: tiled global statistics --------------------------------
    stats = _global_stats(x2, tile_bc, tile_hw)
    mean, std, mn, mx = stats[0], stats[1], stats[2], stats[3]

    if max_num == 0:
        return x

    # ---- scalar RNG glue: erase count + patch coordinates ------------------
    szx = int(pct * h)
    szy = int(pct * w)
    k_num, k_st, k_z = jax.random.split(key, 3)
    num = jax.random.randint(k_num, (), 0, max_num + 1)        # 0..max_num incl.
    u = jax.random.uniform(k_st, (max_num, 2), dtype=jnp.float32)
    stx = jnp.floor(u[:, 0] * (1.0 - pct) * h).astype(jnp.int32)
    sty = jnp.floor(u[:, 1] * (1.0 - pct) * w).astype(jnp.int32)
    active = jnp.arange(max_num) < num

    coords = jnp.stack(
        [stx,
         jnp.where(active, szx, 0),
         sty,
         jnp.where(active, szy, 0)],
        axis=1).reshape(-1).astype(jnp.int32)                  # flat 1-D SMEM

    # ---- patch-sized noise (fresh per erase, ~pct^2 of the tensor each),
    # ---- scaled + clamped outside the kernel, composited into one plane ----
    z = jax.random.normal(k_z, (max_num, bc, max(szx, 0), max(szy, 0)),
                          dtype=jnp.float32)
    patches = jnp.clip(mean + std * z, mn, mx)                 # clamp fused here
    plane = jnp.zeros((bc, h, w), jnp.float32)
    for i in range(max_num):        # later active erases overwrite earlier ones
        cur = jax.lax.dynamic_slice(
            plane, (jnp.int32(0), stx[i], sty[i]), (bc, szx, szy))
        upd = jnp.where(active[i], patches[i], cur)
        plane = jax.lax.dynamic_update_slice(
            plane, upd, (jnp.int32(0), stx[i], sty[i]))
    noise2 = plane.reshape(bc, hw).astype(x.dtype)

    # ---- kernel 2: tiled, lane-dense, pipelined masked fill ----------------
    out2 = pl.pallas_call(
        _make_erase_kernel(w, tile_hw, max_num),
        out_shape=jax.ShapeDtypeStruct((bc, hw), x.dtype),
        grid=(bc // tile_bc, hw // tile_hw),
        in_specs=[
            pl.BlockSpec(memory_space=pltpu.MemorySpace.SMEM),      # coords
            pl.BlockSpec((tile_bc, tile_hw), lambda i, j: (i, j)),  # x
            pl.BlockSpec((tile_bc, tile_hw), lambda i, j: (i, j)),  # noise
        ],
        out_specs=pl.BlockSpec((tile_bc, tile_hw), lambda i, j: (i, j)),
        input_output_aliases={1: 0},           # write the result in place of x
        compiler_params=pltpu.CompilerParams(
            dimension_semantics=("parallel", "parallel"),
            vmem_limit_bytes=32 * 1024 * 1024),
    )(coords, x2, noise2)
    return out2.reshape(x.shape)


if __name__ == "__main__":
    key = jax.random.PRNGKey(0)
    kx, krand = jax.random.split(key)
    x = jax.random.normal(kx, (2, 4, 16, 16), dtype=jnp.float32)

    # record bounds before the call (the erase call may alias/donate x's view)
    x_min = float(jnp.min(x))
    x_max = float(jnp.max(x))

    y = rand_erase(x, krand)
    y = jax.block_until_ready(y)

    # sanity: shape/dtype preserved, values finite and inside [min, max]
    assert y.shape == x.shape and y.dtype == x.dtype
    assert bool(jnp.all(jnp.isfinite(y)))
    assert bool(jnp.all(y >= x_min - 1e-5))
    assert bool(jnp.all(y <= x_max + 1e-5))
    print("KERNEL_OK")
</pallas_src>

<mosaic_0001>
module attributes {stable_mosaic.version = 11 : i64} {
  func.func @kernel(%arg0: i32, %arg1: i32, %arg2: memref<8x256xf32, #tpu.memory_space<vmem>>, %arg3: memref<4xf32, #tpu.memory_space<smem>>, %arg4: memref<4xf32, #tpu.memory_space<smem>>) attributes {dimension_semantics = [#tpu.dimension_semantics<arbitrary>, #tpu.dimension_semantics<arbitrary>], iteration_bounds = array<i64: 1, 1>, scalar_prefetch = 0 : i64, scratch_operands = 1 : i64, tpu.core_type = #tpu.core_type<tc>, window_params = [{transform_indices = @transform_0, window_bounds = array<i64: 8, 256>}, {transform_indices = @transform_1, window_bounds = array<i64: 4>}]} {
    %c0_i32 = arith.constant 0 : i32
    %0 = arith.cmpi eq, %arg0, %c0_i32 : i32
    %c0_i32_0 = arith.constant 0 : i32
    %1 = arith.cmpi eq, %arg1, %c0_i32_0 : i32
    %2 = arith.andi %0, %1 : i1
    %3 = arith.extui %2 : i1 to i32
    %c0_i32_1 = arith.constant 0 : i32
    %4 = arith.cmpi ne, %3, %c0_i32_1 : i32
    scf.if %4 {
      %cst_14 = arith.constant 0.000000e+00 : f32
      %c0_15 = arith.constant 0 : index
      %40 = memref.load %arg4[%c0_15] : memref<4xf32, #tpu.memory_space<smem>>
      memref.store %cst_14, %arg4[%c0_15] : memref<4xf32, #tpu.memory_space<smem>>
      %cst_16 = arith.constant 0.000000e+00 : f32
      %c1_17 = arith.constant 1 : index
      %41 = memref.load %arg4[%c1_17] : memref<4xf32, #tpu.memory_space<smem>>
      memref.store %cst_16, %arg4[%c1_17] : memref<4xf32, #tpu.memory_space<smem>>
      %cst_18 = arith.constant 0x7F800000 : f32
      %c2_19 = arith.constant 2 : index
      %42 = memref.load %arg4[%c2_19] : memref<4xf32, #tpu.memory_space<smem>>
      memref.store %cst_18, %arg4[%c2_19] : memref<4xf32, #tpu.memory_space<smem>>
      %cst_20 = arith.constant 0xFF800000 : f32
      %c3_21 = arith.constant 3 : index
      %43 = memref.load %arg4[%c3_21] : memref<4xf32, #tpu.memory_space<smem>>
      memref.store %cst_20, %arg4[%c3_21] : memref<4xf32, #tpu.memory_space<smem>>
    } else {
    }
    %c0 = arith.constant 0 : index
    %c0_2 = arith.constant 0 : index
    %5 = vector.load %arg2[%c0, %c0_2] : memref<8x256xf32, #tpu.memory_space<vmem>>, vector<8x256xf32>
    %c0_3 = arith.constant 0 : index
    %6 = memref.load %arg4[%c0_3] : memref<4xf32, #tpu.memory_space<smem>>
    %7 = vector.shape_cast %5 : vector<8x256xf32> to vector<1x8x256xf32>
    %cst = arith.constant dense<0.000000e+00> : vector<1xf32>
    %8 = vector.multi_reduction <add>, %7, %cst [1, 2] : vector<1x8x256xf32> to vector<1xf32>
    %9 = vector.shape_cast %8 : vector<1xf32> to vector<1x1x1xf32>
    %10 = vector.extract %9[0, 0, 0] : f32 from vector<1x1x1xf32>
    %11 = arith.addf %6, %10 : f32
    %c0_4 = arith.constant 0 : index
    %12 = memref.load %arg4[%c0_4] : memref<4xf32, #tpu.memory_space<smem>>
    memref.store %11, %arg4[%c0_4] : memref<4xf32, #tpu.memory_space<smem>>
    %c1 = arith.constant 1 : index
    %13 = memref.load %arg4[%c1] : memref<4xf32, #tpu.memory_space<smem>>
    %14 = arith.mulf %5, %5 : vector<8x256xf32>
    %15 = vector.shape_cast %14 : vector<8x256xf32> to vector<1x8x256xf32>
    %cst_5 = arith.constant dense<0.000000e+00> : vector<1xf32>
    %16 = vector.multi_reduction <add>, %15, %cst_5 [1, 2] : vector<1x8x256xf32> to vector<1xf32>
    %17 = vector.shape_cast %16 : vector<1xf32> to vector<1x1x1xf32>
    %18 = vector.extract %17[0, 0, 0] : f32 from vector<1x1x1xf32>
    %19 = arith.addf %13, %18 : f32
    %c1_6 = arith.constant 1 : index
    %20 = memref.load %arg4[%c1_6] : memref<4xf32, #tpu.memory_space<smem>>
    memref.store %19, %arg4[%c1_6] : memref<4xf32, #tpu.memory_space<smem>>
    %c2 = arith.constant 2 : index
    %21 = memref.load %arg4[%c2] : memref<4xf32, #tpu.memory_space<smem>>
    %22 = vector.shape_cast %5 : vector<8x256xf32> to vector<1x8x256xf32>
    %cst_7 = arith.constant dense<0x7F800000> : vector<1xf32>
    %23 = vector.multi_reduction <minimumf>, %22, %cst_7 [1, 2] : vector<1x8x256xf32> to vector<1xf32>
    %24 = vector.shape_cast %23 : vector<1xf32> to vector<1x1x1xf32>
    %25 = vector.extract %24[0, 0, 0] : f32 from vector<1x1x1xf32>
    %26 = arith.minimumf %21, %25 : f32
    %c2_8 = arith.constant 2 : index
    %27 = memref.load %arg4[%c2_8] : memref<4xf32, #tpu.memory_space<smem>>
    memref.store %26, %arg4[%c2_8] : memref<4xf32, #tpu.memory_space<smem>>
    %c3 = arith.constant 3 : index
    %28 = memref.load %arg4[%c3] : memref<4xf32, #tpu.memory_space<smem>>
    %29 = vector.shape_cast %5 : vector<8x256xf32> to vector<1x8x256xf32>
    %cst_9 = arith.constant dense<0xFF800000> : vector<1xf32>
    %30 = vector.multi_reduction <maximumf>, %29, %cst_9 [1, 2] : vector<1x8x256xf32> to vector<1xf32>
    %31 = vector.shape_cast %30 : vector<1xf32> to vector<1x1x1xf32>
    %32 = vector.extract %31[0, 0, 0] : f32 from vector<1x1x1xf32>
    %33 = arith.maximumf %28, %32 : f32
    %c3_10 = arith.constant 3 : index
    %34 = memref.load %arg4[%c3_10] : memref<4xf32, #tpu.memory_space<smem>>
    memref.store %33, %arg4[%c3_10] : memref<4xf32, #tpu.memory_space<smem>>
    %c0_i32_11 = arith.constant 0 : i32
    %35 = arith.cmpi eq, %arg0, %c0_i32_11 : i32
    %c0_i32_12 = arith.constant 0 : i32
    %36 = arith.cmpi eq, %arg1, %c0_i32_12 : i32
    %37 = arith.andi %35, %36 : i1
    %38 = arith.extui %37 : i1 to i32
    %c0_i32_13 = arith.constant 0 : i32
    %39 = arith.cmpi ne, %38, %c0_i32_13 : i32
    scf.if %39 {
      %c0_14 = arith.constant 0 : index
      %40 = memref.load %arg4[%c0_14] : memref<4xf32, #tpu.memory_space<smem>>
      %c1_15 = arith.constant 1 : index
      %41 = memref.load %arg4[%c1_15] : memref<4xf32, #tpu.memory_space<smem>>
      %cst_16 = arith.constant 2.048000e+03 : f32
      %42 = arith.divf %40, %cst_16 : f32
      %cst_17 = arith.constant 2.048000e+03 : f32
      %43 = arith.mulf %cst_17, %42 : f32
      %44 = arith.mulf %43, %42 : f32
      %45 = arith.subf %41, %44 : f32
      %cst_18 = arith.constant 2.047000e+03 : f32
      %46 = arith.divf %45, %cst_18 : f32
      %c0_19 = arith.constant 0 : index
      %47 = memref.load %arg3[%c0_19] : memref<4xf32, #tpu.memory_space<smem>>
      memref.store %42, %arg3[%c0_19] : memref<4xf32, #tpu.memory_space<smem>>
      %cst_20 = arith.constant 0.000000e+00 : f32
      %48 = arith.maximumf %46, %cst_20 : f32
      %49 = math.sqrt %48 : f32
      %c1_21 = arith.constant 1 : index
      %50 = memref.load %arg3[%c1_21] : memref<4xf32, #tpu.memory_space<smem>>
      memref.store %49, %arg3[%c1_21] : memref<4xf32, #tpu.memory_space<smem>>
      %c2_22 = arith.constant 2 : index
      %51 = memref.load %arg4[%c2_22] : memref<4xf32, #tpu.memory_space<smem>>
      %c2_23 = arith.constant 2 : index
      %52 = memref.load %arg3[%c2_23] : memref<4xf32, #tpu.memory_space<smem>>
      memref.store %51, %arg3[%c2_23] : memref<4xf32, #tpu.memory_space<smem>>
      %c3_24 = arith.constant 3 : index
      %53 = memref.load %arg4[%c3_24] : memref<4xf32, #tpu.memory_space<smem>>
      %c3_25 = arith.constant 3 : index
      %54 = memref.load %arg3[%c3_25] : memref<4xf32, #tpu.memory_space<smem>>
      memref.store %53, %arg3[%c3_25] : memref<4xf32, #tpu.memory_space<smem>>
    } else {
    }
    return
  }
  func.func @transform_0(%arg0: i32, %arg1: i32) -> (i32, i32) {
    %c0_i32 = arith.constant 0 : i32
    return %arg0, %arg1 : i32, i32
  }
  func.func @transform_1(%arg0: i32, %arg1: i32) -> i32 {
    %c0_i32 = arith.constant 0 : i32
    %c0_i32_0 = arith.constant 0 : i32
    return %c0_i32 : i32
  }
}

</mosaic_0001>

<llo_original>
// kernel: tpu_custom_call.1
$region0: #{tpu_custom_call.1}
  #allocation0 [shape = 'u32[]', space=smem, size = 0x4, offset = 0x4, fixed_abs, tag = 'smem constant byte address 0x4 - core index']
  #allocation1 [shape = 'u32[144,128]{1,0:T(1,128)}', space=vmem, size = 0x12000, scoped, tag = 'internal scratch']
  #allocation2 [shape = 'f32[4]{0:T(128)}', space=smem, size = 0x200, scoped, tag = 'scratch operand']
  %s0 = inlined_call_operand.hbm [shape: f32[8,256], index: 0, kind: input, shape index: {}]
  %s1 = inlined_call_operand.hbm [shape: f32[4], index: 1, kind: output, shape index: {}]
  %s2 = sld [smem:[#allocation0]]
  $region26: #{tpu_custom_call.1} parent=0
    _
  %s4 = ssub.s32 1, %s2
  %s5 = scalar_select 0, %s4, %s2
  $region1: #{tpu_custom_call.1} parent=0
    #allocation3 [shape = 'u8[8192]{0}', space=vmem, size = 0x2000, scoped, tag = 'input window, operand 0, single buffered']
    #allocation4 [shape = 's32[1]{0}', space=sflag, size = 0x4, scoped, tag = 'scoped memory for tpu_custom_call.1']
    #allocation5 [shape = 's32[1]{0}', space=sflag, size = 0x4, scoped, tag = 'scoped memory for tpu_custom_call.1']
    #allocation6 [shape = 'u8[512]{0}', space=smem, size = 0x200, scoped, tag = 'output window, operand 0, single buffered']
    %6 = vsyncpa [#allocation4], 0
    %7 = vsyncpa [#allocation5], 0
    // Predicated region
    $region2: #{tpu_custom_call.1} parent=1 // pred_check
      _
    $region3: #{tpu_custom_call.1} parent=1 // pred_check_branch
      %9 = sbr.rel (0) target = $region5
    $region4: #{tpu_custom_call.1} parent=1 // pred_region
      %s11 = ssub.s32 256, 256
      %12 = vsyncadd [#allocation4], %s11
      %s14 = sshll.u32 [#allocation3], 4
      %s15 = int_to_ptr.vmem [resolvable:$true] %s14
      %17 = dma.hbm_to_vmem [thread:$0]  %s0, 256, %s15, [#allocation4]
    $region5: #{tpu_custom_call.1} parent=1 // pred_fallthru
      _
    // Predicated region
    $region6: #{tpu_custom_call.1} parent=1 // pred_check
      _
    $region7: #{tpu_custom_call.1} parent=1 // pred_check_branch
      %19 = sbr.rel (0) target = $region9
    $region8: #{tpu_custom_call.1} parent=1 // pred_region
      %20 = dma.done [#allocation4], 256
    $region9: #{tpu_custom_call.1} parent=1 // pred_fallthru
      _
    %p21 = scmp.eq.s32.totalorder 0, 0
    %p22 = scmp.eq.s32.totalorder 0, 0
    %p23 = pnand %p21, %p22
    %p24 = pneg %p23
    // Predicated region
    $region10: #{tpu_custom_call.1} parent=1 // pred_check
      _
    $region11: #{tpu_custom_call.1} parent=1 // pred_check_branch
      %26 = sbr.rel (%p23) target = $region13
    $region12: #{tpu_custom_call.1} parent=1 // pred_region
      %s27 = scalar_lea.smem [#allocation2], 0
      %28 = sst [smem:[%s27]] 0.0
      %s29 = scalar_lea.smem [#allocation2], 1
      %30 = sst [smem:[%s29]] 0.0
      %s31 = scalar_lea.smem [#allocation2], 2
      %32 = sst [smem:[%s31]] inf
      %s33 = scalar_lea.smem [#allocation2], 3
      %34 = sst [smem:[%s33]] -inf
    $region13: #{tpu_custom_call.1} parent=1 // pred_fallthru
      _
    %v35 = vld [vmem:[#allocation3] sm:$0xff]
    %v36 = vld [vmem:[#allocation3 + $0x8] sm:$0xff]
    %s37 = sld [smem:[#allocation2]]
    %v38 = vadd.f32 %v35, %v36
    %39 = vadd.xlane.f32.xlu0 %v38
    %v40 = vpop.xlane.xlu0 %39
    %v41 = vrot.slane %v40, 4
    %v42 = vadd.f32 %v40, %v41
    %v43 = vrot.slane %v42, 2
    %v44 = vadd.f32 %v42, %v43
    %v45 = vrot.slane %v44, 1
    %v46 = vadd.f32 %v44, %v45
    %s47 = vtos %v46
    %s48 = sadd.f32 %s37, %s47
    %s49 = scalar_lea.smem [#allocation2], 0
    %50 = sst [smem:[%s49]] %s48
    %s51 = sld [smem:[#allocation2 + $0x1]]
    %v52 = vmul.f32 %v35, %v35
    %v53 = vmul.f32 %v36, %v36
    %v54 = vadd.f32 %v52, %v53
    %55 = vadd.xlane.f32.xlu0 %v54
    %v56 = vpop.xlane.xlu0 %55
    %v57 = vrot.slane %v56, 4
    %v58 = vadd.f32 %v56, %v57
    %v59 = vrot.slane %v58, 2
    %v60 = vadd.f32 %v58, %v59
    %v61 = vrot.slane %v60, 1
    %v62 = vadd.f32 %v60, %v61
    %s63 = vtos %v62
    %s64 = sadd.f32 %s51, %s63
    %s65 = scalar_lea.smem [#allocation2], 1
    %66 = sst [smem:[%s65]] %s64
    %s67 = sld [smem:[#allocation2 + $0x2]]
    %v68 = vmin.f32 %v35, %v36
    %69 = vmin.xlane.f32.xlu0 %v68
    %v70 = vpop.xlane.xlu0 %69
    %v71 = vrot.slane %v70, 4
    %v72 = vmin.f32 %v70, %v71
    %v73 = vrot.slane %v72, 2
    %v74 = vmin.f32 %v72, %v73
    %v75 = vrot.slane %v74, 1
    %v76 = vmin.f32 %v74, %v75
    %s77 = vtos %v76
    %s78 = smin.f32 %s67, %s77
    %s79 = scalar_lea.smem [#allocation2], 2
    %80 = sst [smem:[%s79]] %s78
    %s81 = sld [smem:[#allocation2 + $0x3]]
    %v82 = vmax.f32 %v35, %v36
    %83 = vmax.xlane.f32.xlu0 %v82
    %v84 = vpop.xlane.xlu0 %83
    %v85 = vrot.slane %v84, 4
    %v86 = vmax.f32 %v84, %v85
    %v87 = vrot.slane %v86, 2
    %v88 = vmax.f32 %v86, %v87
    %v89 = vrot.slane %v88, 1
    %v90 = vmax.f32 %v88, %v89
    %s91 = vtos %v90
    %s92 = smax.f32 %s81, %s91
    %s93 = scalar_lea.smem [#allocation2], 3
    %94 = sst [smem:[%s93]] %s92
    // Predicated region
    $region14: #{tpu_custom_call.1} parent=1 // pred_check
      _
    $region15: #{tpu_custom_call.1} parent=1 // pred_check_branch
      %96 = sbr.rel (%p23) target = $region17
    $region16: #{tpu_custom_call.1} parent=1 // pred_region
      %s97 = sld [smem:[#allocation2]]
      %s98 = sld [smem:[#allocation2 + $0x1]]
      %v99 = vrcp.pop 2048.0
      %s100 = vtos %v99
      %s101 = smul.f32 %s97, %s100
      %s102 = smul.f32 %s101, 2048.0
      %s103 = smul.f32 %s102, %s101
      %s104 = ssub.f32 %s98, %s103
      %v105 = vrcp.pop 2047.0
      %s106 = vtos %v105
      %s107 = smul.f32 %s104, %s106
      %s108 = scalar_lea.smem [#allocation6], 0
      %109 = sst [smem:[%s108]] %s101
      %s110 = smax.f32 %s107, 0.0
      %v111 = vstv %s110
      %v112 = vrsqrt.pop %v111
      %v113 = vmul.f32 %v111, %v112
      %vm114 = vcmp.eq.f32.partialorder %v111, inf
      %v115 = vsel %vm114, %v111, %v113
      %vm116 = vcmp.eq.f32.partialorder %v111, 0.0
      %v117 = vand.u32 %v111, 2147483648
      %v118 = vsel %vm116, %v117, %v115
      %s119 = vtos %v118
      %s120 = scalar_lea.smem [#allocation6], 1
      %121 = sst [smem:[%s120]] %s119
      %s122 = sld [smem:[#allocation2 + $0x2]]
      %s123 = scalar_lea.smem [#allocation6], 2
      %124 = sst [smem:[%s123]] %s122
      %s125 = sld [smem:[#allocation2 + $0x3]]
      %s126 = scalar_lea.smem [#allocation6], 3
      %127 = sst [smem:[%s126]] %s125
    $region17: #{tpu_custom_call.1} parent=1 // pred_fallthru
      _
    // Predicated region
    $region18: #{tpu_custom_call.1} parent=1 // pred_check
      _
    $region19: #{tpu_custom_call.1} parent=1 // pred_check_branch
      %129 = sbr.rel (0) target = $region21
    $region20: #{tpu_custom_call.1} parent=1 // pred_region
      %s131 = ssub.s32 16, 16
      %132 = vsyncadd [#allocation5], %s131
      %135 = dma.smem_to_hbm [#allocation6], 16, %s1, [#allocation5]
    $region21: #{tpu_custom_call.1} parent=1 // pred_fallthru
      _
    // Predicated region
    $region22: #{tpu_custom_call.1} parent=1 // pred_check
      _
    $region23: #{tpu_custom_call.1} parent=1 // pred_check_branch
      %137 = sbr.rel (0) target = $region25
    $region24: #{tpu_custom_call.1} parent=1 // pred_region
      %138 = dma.done [#allocation5], 16
    $region25: #{tpu_custom_call.1} parent=1 // pred_fallthru
      _
    %139 = sfence
    %140 = vsyncpa [#allocation4], 1
    %141 = vsyncpa [#allocation5], 1

</llo_original>
